<compile_context>
chip_gen: v7x
topology: tpu7x:2x2x1
jax: 0.10.0
libtpu: 0.0.40
codegen_flags: <defaults>
</compile_context>

<pallas_src>
import functools
import math

import jax
import jax.numpy as jnp
from jax.experimental import pallas as pl
from jax.experimental.pallas import tpu as pltpu


def _round_up(x, m):
    return ((x + m - 1) // m) * m


# ----------------------------------------------------------------------------- kernels
def _linear_kernel(x_ref, w_ref, b_ref, o_ref):
    # x_ref: (TB, F)  w_ref: (F, Cpad)  b_ref: (1, Cpad)  o_ref: (TB, Cpad)
    acc = jnp.dot(x_ref[...], w_ref[...], preferred_element_type=jnp.float32)
    # Bias add in f32 (free VPU filler under the MXU); cast only on the final store.
    o_ref[...] = (acc + b_ref[...]).astype(o_ref.dtype)


def _linear_kernel_ktiled(x_ref, w_ref, b_ref, o_ref, acc_ref):
    # Grid = (B tiles, K tiles over F).  acc_ref: (TB, Cpad) f32 scratch.
    k = pl.program_id(1)

    @pl.when(k == 0)
    def _():
        acc_ref[...] = jnp.zeros_like(acc_ref)

    acc_ref[...] += jnp.dot(x_ref[...], w_ref[...],
                            preferred_element_type=jnp.float32)

    @pl.when(k == pl.num_programs(1) - 1)
    def _():
        o_ref[...] = (acc_ref[...] + b_ref[...]).astype(o_ref.dtype)


# ----------------------------------------------------------------------------- params
def prepare_classifier_params(weight, bias, *, compute_dtype=None):
    """Pad/transpose nn.Linear params once (outside the per-call jit path).

    weight: (C, F) PyTorch layout, bias: (C,)  ->  (F, Cpad) weight, (1, Cpad) f32 bias.
    """
    C, F = weight.shape
    c_pad = _round_up(C, 128)
    w_dtype = compute_dtype if compute_dtype is not None else weight.dtype
    w_t_pad = jnp.zeros((F, c_pad), dtype=w_dtype).at[:, :C].set(
        weight.T.astype(w_dtype))
    # Bias stays f32: it is added to the f32 accumulator regardless of compute dtype.
    b_pad = jnp.zeros((1, c_pad), dtype=jnp.float32).at[0, :C].set(
        bias.astype(jnp.float32))
    return w_t_pad, b_pad


# ----------------------------------------------------------------------------- tiling
def _pick_tiles(B, F, c_pad, x_item, w_item, o_item, block_b, budget):
    """Pick (tb, tk); tk=None means no F (reduction) tiling."""
    def resident(tb, tk):
        # double-buffered x / weight / output blocks + f32 accumulator scratch
        return (2 * tb * tk * x_item + 2 * tk * c_pad * w_item
                + 2 * tb * c_pad * o_item + tb * c_pad * 4)

    # Guarantee >=2 grid steps over B whenever possible so v7x's two TensorCores
    # both engage; keep the sublane a multiple of 16 (bf16-safe).
    tb = max(16, min(block_b, _round_up(pl.cdiv(B, 2), 16)))

    while True:
        if resident(tb, F) <= budget:
            return tb, None
        if F % 128 == 0 and F > 128:
            m = F // 128
            for d in range(2, m + 1):
                if m % d == 0 and resident(tb, F // d) <= budget:
                    return tb, F // d
        if tb <= 16:
            # Smallest clean tiling we can express; let the compiler complain if
            # even this does not fit.
            if F % 128 == 0 and F > 128:
                return tb, 128
            return tb, None
        tb = max(16, tb // 2)


# ----------------------------------------------------------------------------- forward
@functools.partial(
    jax.jit,
    static_argnames=("num_classes", "block_b", "gridless_max_b",
                     "vmem_budget_bytes", "return_padded", "compute_dtype"))
def classifier_forward_padded(x, w_t_pad, b_pad, *, num_classes,
                              block_b=512, gridless_max_b=512,
                              vmem_budget_bytes=24 * 1024 * 1024,
                              return_padded=False, compute_dtype=None):
    """x: (B, ...) with prod(x.shape[1:]) == F; w_t_pad: (F, Cpad); b_pad: (1, Cpad)."""
    B = x.shape[0]
    F = math.prod(x.shape[1:])
    c_pad = w_t_pad.shape[1]
    assert w_t_pad.shape[0] == F, (w_t_pad.shape, F)

    # torch.flatten(x, start_dim=1)
    x_flat = x.reshape(B, F)
    out_dtype = x.dtype
    if compute_dtype is not None:
        x_flat = x_flat.astype(compute_dtype)
        w_t_pad = w_t_pad.astype(compute_dtype)  # no-op if prepared in compute_dtype

    x_item = x_flat.dtype.itemsize
    w_item = w_t_pad.dtype.itemsize
    o_item = jnp.dtype(out_dtype).itemsize

    gridless_bytes = (B * F * x_item + F * c_pad * w_item
                      + c_pad * 4 + B * c_pad * o_item)

    if B <= gridless_max_b and gridless_bytes <= vmem_budget_bytes:
        # Small-B path: single-shot call, everything resident in VMEM.
        out = pl.pallas_call(
            _linear_kernel,
            out_shape=jax.ShapeDtypeStruct((B, c_pad), out_dtype),
            in_specs=[
                pl.BlockSpec(memory_space=pltpu.MemorySpace.VMEM),
                pl.BlockSpec(memory_space=pltpu.MemorySpace.VMEM),
                pl.BlockSpec(memory_space=pltpu.MemorySpace.VMEM),
            ],
            out_specs=pl.BlockSpec(memory_space=pltpu.MemorySpace.VMEM),
        )(x_flat, w_t_pad, b_pad)
    else:
        tb, tk = _pick_tiles(B, F, c_pad, x_item, w_item, o_item,
                             block_b, vmem_budget_bytes)
        num_b = pl.cdiv(B, tb)

        if tk is None:
            # Batch-tiled path: weight/bias blocks invariant, B axis parallel
            # (shards across v7x's 2 TensorCores; harmless on v5e/v6e).
            # TODO(synk): if v7x profiling shows exposed DMA, add
            # pipeline_mode=pl.Buffered(3) to the x spec.
            out = pl.pallas_call(
                _linear_kernel,
                out_shape=jax.ShapeDtypeStruct((B, c_pad), out_dtype),
                grid_spec=pltpu.PrefetchScalarGridSpec(
                    num_scalar_prefetch=0,
                    grid=(num_b,),
                    in_specs=[
                        pl.BlockSpec((tb, F), lambda i: (i, 0)),
                        pl.BlockSpec((F, c_pad), lambda i: (0, 0)),
                        pl.BlockSpec((1, c_pad), lambda i: (0, 0)),
                    ],
                    out_specs=pl.BlockSpec((tb, c_pad), lambda i: (i, 0)),
                ),
                compiler_params=pltpu.CompilerParams(
                    dimension_semantics=("parallel",),
                ),
            )(x_flat, w_t_pad, b_pad)
        else:
            # VMEM-constrained path (large S*E, esp. v7x): tile the reduction
            # dim F and accumulate in an f32 VMEM scratch.
            out = pl.pallas_call(
                _linear_kernel_ktiled,
                out_shape=jax.ShapeDtypeStruct((B, c_pad), out_dtype),
                grid_spec=pltpu.PrefetchScalarGridSpec(
                    num_scalar_prefetch=0,
                    grid=(num_b, F // tk),
                    in_specs=[
                        pl.BlockSpec((tb, tk), lambda i, k: (i, k)),
                        pl.BlockSpec((tk, c_pad), lambda i, k: (k, 0)),
                        pl.BlockSpec((1, c_pad), lambda i, k: (0, 0)),
                    ],
                    out_specs=pl.BlockSpec((tb, c_pad), lambda i, k: (i, 0)),
                    scratch_shapes=[pltpu.VMEM((tb, c_pad), jnp.float32)],
                ),
                compiler_params=pltpu.CompilerParams(
                    dimension_semantics=("parallel", "arbitrary"),
                ),
            )(x_flat, w_t_pad, b_pad)

    if return_padded or c_pad == num_classes:
        # Lane-dense padded output (columns >= num_classes are bias-0 logits);
        # lets the consumer skip an extra HBM pass.
        return out
    return out[:, :num_classes]


def classifier_forward(x, weight, bias, **kwargs):
    """Convenience wrapper taking PyTorch-layout params (pads/transposes per call)."""
    compute_dtype = kwargs.pop("compute_dtype", None)
    w_t_pad, b_pad = prepare_classifier_params(weight, bias,
                                               compute_dtype=compute_dtype)
    return classifier_forward_padded(x, w_t_pad, b_pad,
                                     num_classes=weight.shape[0],
                                     compute_dtype=compute_dtype, **kwargs)


# ----------------------------------------------------------------------------- test
if __name__ == "__main__":
    # config.model.input_sequence_length = 8
    # config.model.embedding_dim         = 32
    # config.data.num_classes            = 10
    B, S, E, C = 2, 8, 32, 10
    F = S * E

    key = jax.random.PRNGKey(0)
    kx, kw, kb = jax.random.split(key, 3)

    x = jax.random.normal(kx, (B, S, E), dtype=jnp.float32)
    bound = 1.0 / (F ** 0.5)  # mimics nn.Linear uniform init range
    weight = jax.random.uniform(kw, (C, F), dtype=jnp.float32,
                                minval=-bound, maxval=bound)
    bias = jax.random.uniform(kb, (C,), dtype=jnp.float32,
                              minval=-bound, maxval=bound)

    # Parameters padded / transposed ONCE, outside the per-call jit path.
    w_t_pad, b_pad = prepare_classifier_params(weight, bias)

    # 1) Gridless small-B path.
    out = jax.block_until_ready(
        classifier_forward_padded(x, w_t_pad, b_pad, num_classes=C))
    ref = x.reshape(B, F) @ weight.T + bias
    assert out.shape == (B, C)
    assert jnp.allclose(out, ref, atol=1e-5, rtol=1e-5)

    # 2) Batch-tiled grid path (small tiles so the test stays cheap).
    B_big = 48
    xb = jax.random.normal(jax.random.PRNGKey(1), (B_big, S, E), dtype=jnp.float32)
    ref_big = xb.reshape(B_big, F) @ weight.T + bias
    out_big = jax.block_until_ready(
        classifier_forward_padded(xb, w_t_pad, b_pad, num_classes=C,
                                  block_b=16, gridless_max_b=8))
    assert out_big.shape == (B_big, C)
    assert jnp.allclose(out_big, ref_big, atol=1e-5, rtol=1e-5)

    # 3) K-tiled (F-reduction) fallback path, forced via a tiny VMEM budget.
    out_k = jax.block_until_ready(
        classifier_forward_padded(xb, w_t_pad, b_pad, num_classes=C,
                                  block_b=16, gridless_max_b=8,
                                  vmem_budget_bytes=1))
    assert jnp.allclose(out_k, ref_big, atol=1e-5, rtol=1e-5)

    print("KERNEL_OK")
</pallas_src>

<mosaic_0001>
module attributes {stable_mosaic.version = 11 : i64} {
  func.func @_linear_kernel(%arg0: memref<2x256xf32, #tpu.memory_space<vmem>>, %arg1: memref<256x128xf32, #tpu.memory_space<vmem>>, %arg2: memref<1x128xf32, #tpu.memory_space<vmem>>, %arg3: memref<2x128xf32, #tpu.memory_space<vmem>>) attributes {dimension_semantics = [], scalar_prefetch = 0 : i64, scratch_operands = 0 : i64, tpu.core_type = #tpu.core_type<tc>} {
    %c0 = arith.constant 0 : index
    %c0_0 = arith.constant 0 : index
    %0 = vector.load %arg0[%c0, %c0_0] : memref<2x256xf32, #tpu.memory_space<vmem>>, vector<2x256xf32>
    %c0_1 = arith.constant 0 : index
    %c0_2 = arith.constant 0 : index
    %1 = vector.load %arg1[%c0_1, %c0_2] : memref<256x128xf32, #tpu.memory_space<vmem>>, vector<256x128xf32>
    %cst = arith.constant dense<0.000000e+00> : vector<2x128xf32>
    %2 = tpu.matmul %0, %1, %cst {dimension_numbers = #tpu.dot_dimension_numbers<[1], [0], [0], [1], [0, 0, 1, 1], [], []>} : vector<2x256xf32>, vector<256x128xf32>, vector<2x128xf32> -> vector<2x128xf32>
    %c0_3 = arith.constant 0 : index
    %c0_4 = arith.constant 0 : index
    %3 = vector.load %arg2[%c0_3, %c0_4] : memref<1x128xf32, #tpu.memory_space<vmem>>, vector<1x128xf32>
    %4 = vector.broadcast %3 : vector<1x128xf32> to vector<2x128xf32>
    %5 = arith.addf %2, %4 : vector<2x128xf32>
    %c0_5 = arith.constant 0 : index
    %c0_6 = arith.constant 0 : index
    %6 = vector.load %arg3[%c0_5, %c0_6] : memref<2x128xf32, #tpu.memory_space<vmem>>, vector<2x128xf32>
    tpu.vector_store %arg3[%c0_5, %c0_6], %5 {strides = array<i32>} : memref<2x128xf32, #tpu.memory_space<vmem>>, vector<2x128xf32>,
    return
  }
}

</mosaic_0001>

<llo_original>
// kernel: classifier_forward_padded.1
$region0: #{classifier_forward_padded.1}
  #allocation0 [shape = 'u32[]', space=smem, size = 0x4, offset = 0x4, fixed_abs, tag = 'smem constant byte address 0x4 - core index']
  #allocation1 [shape = 'u32[144,128]{1,0:T(1,128)}', space=vmem, size = 0x12000, scoped, tag = 'internal scratch']
  %s0 = inlined_call_operand.vmem [shape: f32[2,256], index: 0, kind: input, shape index: {}]
  %s1 = inlined_call_operand.hbm [shape: f32[256,128], index: 1, kind: input, shape index: {}]
  %s2 = inlined_call_operand.vmem [shape: f32[1,128], index: 2, kind: input, shape index: {}]
  %s3 = inlined_call_operand.hbm [shape: f32[2,128], index: 3, kind: output, shape index: {}]
  %s4 = sld [smem:[#allocation0]]
  $region26: #{classifier_forward_padded.1} parent=0
    _
  %s6 = ssub.s32 1, %s4
  %s7 = scalar_select 0, %s6, %s4
  $region1: #{classifier_forward_padded.1} parent=0
    #allocation2 [shape = 'u8[131072]{0}', space=vmem, size = 0x20000, scoped, tag = 'input window, operand 1, single buffered']
    #allocation3 [shape = 's32[1]{0}', space=sflag, size = 0x4, scoped, tag = 'scoped memory for classifier_forward_padded.1']
    #allocation4 [shape = 's32[1]{0}', space=sflag, size = 0x4, scoped, tag = 'scoped memory for classifier_forward_padded.1']
    #allocation5 [shape = 'u8[1024]{0}', space=vmem, size = 0x400, scoped, tag = 'output window, operand 0, single buffered']
    %8 = vsyncpa [#allocation3], 0
    %9 = vsyncpa [#allocation4], 0
    // Predicated region
    $region2: #{classifier_forward_padded.1} parent=1 // pred_check
      _
    $region3: #{classifier_forward_padded.1} parent=1 // pred_check_branch
      %11 = sbr.rel (0) target = $region5
    $region4: #{classifier_forward_padded.1} parent=1 // pred_region
      _
    $region5: #{classifier_forward_padded.1} parent=1 // pred_fallthru
      _
    // Predicated region
    $region6: #{classifier_forward_padded.1} parent=1 // pred_check
      _
    $region7: #{classifier_forward_padded.1} parent=1 // pred_check_branch
      %13 = sbr.rel (0) target = $region9
    $region8: #{classifier_forward_padded.1} parent=1 // pred_region
      %s15 = ssub.s32 4096, 4096
      %16 = vsyncadd [#allocation3], %s15
      %s17 = sshll.u32 [#allocation2], 4
      %s18 = int_to_ptr.vmem [resolvable:$true] %s17
      %23 = dma.hbm_to_vmem [thread:$0]  %s1, 4096, %s18, [#allocation3], 128, 128, 8
    $region9: #{classifier_forward_padded.1} parent=1 // pred_fallthru
      _
    // Predicated region
    $region10: #{classifier_forward_padded.1} parent=1 // pred_check
      _
    $region11: #{classifier_forward_padded.1} parent=1 // pred_check_branch
      %25 = sbr.rel (0) target = $region13
    $region12: #{classifier_forward_padded.1} parent=1 // pred_region
      _
    $region13: #{classifier_forward_padded.1} parent=1 // pred_fallthru
      _
    // Predicated region
    $region14: #{classifier_forward_padded.1} parent=1 // pred_check
      _
    $region15: #{classifier_forward_padded.1} parent=1 // pred_check_branch
      %27 = sbr.rel (0) target = $region17
    $region16: #{classifier_forward_padded.1} parent=1 // pred_region
      %28 = dma.done [#allocation3], 4096
    $region17: #{classifier_forward_padded.1} parent=1 // pred_fallthru
      _
    %v29 = vld [vmem:[%s0] sm:$0xf]
    %v30 = vld [vmem:[#allocation2] sm:$0xff]
    %v31 = vld [vmem:[#allocation2 + $0x8] sm:$0xff]
    %v32 = vld [vmem:[#allocation2 + $0x10] sm:$0xff]
    %v33 = vld [vmem:[#allocation2 + $0x18] sm:$0xff]
    %v34 = vld [vmem:[#allocation2 + $0x20] sm:$0xff]
    %v35 = vld [vmem:[#allocation2 + $0x28] sm:$0xff]
    %v36 = vld [vmem:[#allocation2 + $0x30] sm:$0xff]
    %v37 = vld [vmem:[#allocation2 + $0x38] sm:$0xff]
    %v38 = vld [vmem:[#allocation2 + $0x40] sm:$0xff]
    %v39 = vld [vmem:[#allocation2 + $0x48] sm:$0xff]
    %v40 = vld [vmem:[#allocation2 + $0x50] sm:$0xff]
    %v41 = vld [vmem:[#allocation2 + $0x58] sm:$0xff]
    %v42 = vld [vmem:[#allocation2 + $0x60] sm:$0xff]
    %v43 = vld [vmem:[#allocation2 + $0x68] sm:$0xff]
    %v44 = vld [vmem:[#allocation2 + $0x70] sm:$0xff]
    %v45 = vld [vmem:[#allocation2 + $0x78] sm:$0xff]
    %v46 = vld [vmem:[#allocation2 + $0x80] sm:$0xff]
    %v47 = vld [vmem:[#allocation2 + $0x88] sm:$0xff]
    %v48 = vld [vmem:[#allocation2 + $0x90] sm:$0xff]
    %v49 = vld [vmem:[#allocation2 + $0x98] sm:$0xff]
    %v50 = vld [vmem:[#allocation2 + $0xa0] sm:$0xff]
    %v51 = vld [vmem:[#allocation2 + $0xa8] sm:$0xff]
    %v52 = vld [vmem:[#allocation2 + $0xb0] sm:$0xff]
    %v53 = vld [vmem:[#allocation2 + $0xb8] sm:$0xff]
    %v54 = vld [vmem:[#allocation2 + $0xc0] sm:$0xff]
    %v55 = vld [vmem:[#allocation2 + $0xc8] sm:$0xff]
    %v56 = vld [vmem:[#allocation2 + $0xd0] sm:$0xff]
    %v57 = vld [vmem:[#allocation2 + $0xd8] sm:$0xff]
    %v58 = vld [vmem:[#allocation2 + $0xe0] sm:$0xff]
    %v59 = vld [vmem:[#allocation2 + $0xe8] sm:$0xff]
    %v60 = vld [vmem:[#allocation2 + $0xf0] sm:$0xff]
    %v61 = vld [vmem:[#allocation2 + $0xf8] sm:$0xff]
    %v62 = vld [vmem:[%s2] sm:$0x1]
    %v64 = vlaneseq
    %v65 = vshrl.u32 %v64, 7
    %v66 = vsub.s32 0, %v65
    %v67 = vrot.slane %v62, %v66
    %v71 = vunpack.c.l.s4 1983009808
    %v72 = vunpack.c.0.s8 %v71
    %v73 = vlaneseq
    %v74 = vshrl.u32 %v73, 7
    %v75 = vsub.s32 %v72, %v74
    %v76 = vrot.slane %v29, %v75
    %v77 = vcombine.high %v76, %v76
    %80 = vmatprep.subr.mxu0 0.0
    %81 = vmatpush1.msra.mxu0 %v30
    %82 = vmatprep.subr.mxu0 0.0
    %83 = vmatpush1.msra.mxu0 %v31
    %84 = vmatprep.subr.mxu0 0.0
    %85 = vmatpush1.msra.mxu0 %v32
    %86 = vmatprep.subr.mxu0 0.0
    %87 = vmatpush1.msra.mxu0 %v33
    %88 = vmatprep.subr.mxu0 0.0
    %89 = vmatpush1.msra.mxu0 %v34
    %90 = vmatprep.subr.mxu0 0.0
    %91 = vmatpush1.msra.mxu0 %v35
    %92 = vmatprep.subr.mxu0 0.0
    %93 = vmatpush1.msra.mxu0 %v36
    %94 = vmatprep.subr.mxu0 0.0
    %95 = vmatpush1.msra.mxu0 %v37
    %96 = vmatprep.subr.mxu0 0.0
    %97 = vmatpush1.msra.mxu0 %v38
    %98 = vmatprep.subr.mxu0 0.0
    %99 = vmatpush1.msra.mxu0 %v39
    %100 = vmatprep.subr.mxu0 0.0
    %101 = vmatpush1.msra.mxu0 %v40
    %102 = vmatprep.subr.mxu0 0.0
    %103 = vmatpush1.msra.mxu0 %v41
    %104 = vmatprep.subr.mxu0 0.0
    %105 = vmatpush1.msra.mxu0 %v42
    %106 = vmatprep.subr.mxu0 0.0
    %107 = vmatpush1.msra.mxu0 %v43
    %108 = vmatprep.subr.mxu0 0.0
    %109 = vmatpush1.msra.mxu0 %v44
    %110 = vmatprep.subr.mxu0 0.0
    %111 = vmatpush1.msra.mxu0 %v45
    %112 = vmatprep.subr.mxu0 0.0
    %113 = vmatpush1.msra.mxu0 %v46
    %114 = vmatprep.subr.mxu0 0.0
    %115 = vmatpush1.msra.mxu0 %v47
    %116 = vmatprep.subr.mxu0 0.0
    %117 = vmatpush1.msra.mxu0 %v48
    %118 = vmatprep.subr.mxu0 0.0
    %119 = vmatpush1.msra.mxu0 %v49
    %120 = vmatprep.subr.mxu0 0.0
    %121 = vmatpush1.msra.mxu0 %v50
    %122 = vmatprep.subr.mxu0 0.0
    %123 = vmatpush1.msra.mxu0 %v51
    %124 = vmatprep.subr.mxu0 0.0
    %125 = vmatpush1.msra.mxu0 %v52
    %126 = vmatprep.subr.mxu0 0.0
    %127 = vmatpush1.msra.mxu0 %v53
    %128 = vmatprep.subr.mxu0 0.0
    %129 = vmatpush1.msra.mxu0 %v54
    %130 = vmatprep.subr.mxu0 0.0
    %131 = vmatpush1.msra.mxu0 %v55
    %132 = vmatprep.subr.mxu0 0.0
    %133 = vmatpush1.msra.mxu0 %v56
    %134 = vmatprep.subr.mxu0 0.0
    %135 = vmatpush1.msra.mxu0 %v57
    %136 = vmatprep.subr.mxu0 0.0
    %137 = vmatpush1.msra.mxu0 %v58
    %138 = vmatprep.subr.mxu0 0.0
    %139 = vmatpush1.msra.mxu0 %v59
    %140 = vmatprep.subr.mxu0 0.0
    %141 = vmatpush1.msra.mxu0 %v60
    %142 = vmatprep.subr.mxu0 0.0
    %143 = vmatpush1.msra.mxu0 %v61
    %144 = vmatprep.mubr.f32.mxu0 %v77
    %145 = vmatmul.mubr.f32.gmra.mrb[0].mxu0 %v76
    %v146 = vpop.f32.mrb[0].mxu0
    %v147 = vadd.f32 %v67, %v146
    %v148 = vpop.f32.mrb[0].mxu0
    %149 = vdwg.mxu0
    %150 = vst [vmem:[#allocation5] sm:$0x3] %v147
    // Predicated region
    $region18: #{classifier_forward_padded.1} parent=1 // pred_check
      _
    $region19: #{classifier_forward_padded.1} parent=1 // pred_check_branch
      %152 = sbr.rel (0) target = $region21
    $region20: #{classifier_forward_padded.1} parent=1 // pred_region
      %s154 = ssub.s32 32, 32
      %155 = vsyncadd [#allocation4], %s154
      %s157 = sshll.u32 [#allocation5], 4
      %s158 = int_to_ptr.vmem [resolvable:$true] %s157
      %160 = dma.vmem_to_hbm [thread:$0]  %s158, 32, %s3, [#allocation4]
    $region21: #{classifier_forward_padded.1} parent=1 // pred_fallthru
      _
    // Predicated region
    $region22: #{classifier_forward_padded.1} parent=1 // pred_check
      _
    $region23: #{classifier_forward_padded.1} parent=1 // pred_check_branch
      %162 = sbr.rel (0) target = $region25
    $region24: #{classifier_forward_padded.1} parent=1 // pred_region
      %163 = dma.done [#allocation4], 32
    $region25: #{classifier_forward_padded.1} parent=1 // pred_fallthru
      _
    %164 = vsyncpa [#allocation3], 1
    %165 = vsyncpa [#allocation4], 1

</llo_original>
